<compile_context>
chip_gen: v5e
topology: v5e:2x2
jax: 0.10.0
libtpu: 0.0.40
codegen_flags: <defaults>
</compile_context>

<pallas_src>
import jax
import jax.numpy as jnp
import numpy as np
from jax.experimental import pallas as pl
from jax.experimental.pallas import tpu as pltpu


# ---------------------------------------------------------------------------
# Helpers
# ---------------------------------------------------------------------------
def _round_up(x, m):
    return ((x + m - 1) // m) * m


def _sublane_pack(dtype):
    # Rows per packed 32-bit sublane group: 8 for f32, 16 for bf16, 32 for int8/bool.
    return max(8, 32 // np.dtype(dtype).itemsize)


def _physical_vmem_bytes():
    try:
        cap = int(pltpu.get_tpu_info().vmem_capacity_bytes)
        if cap > 0:
            return cap
    except Exception:
        pass
    return 64 * 1024 * 1024          # conservative default: v7x per-TensorCore VMEM


def _choose_tiles(B, L, Din, hist_dtype, tb_align, vmem_budget_bytes):
    """Pick (batch tile, history-length chunk), accounting for lane/sublane padding and
    the pipeline's double buffering of the history stream."""
    itemsize = np.dtype(hist_dtype).itemsize
    sub = _sublane_pack(hist_dtype)
    din_pad = _round_up(Din, 128)                      # lane padding
    # History gets ~55% of the kernel budget; the pipeline double-buffers it (x2).
    hist_buf_budget = max(int(vmem_budget_bytes * 0.55) // 2, 256 * 1024)

    def rows_that_fit(tl_):
        return max(1, hist_buf_budget // (_round_up(tl_, sub) * din_pad * itemsize))

    tl = _round_up(L, sub)                             # first try: whole history, one chunk
    if rows_that_fit(tl) < tb_align:
        # Long history: chunk L.  Multiples of 128 keep the mask's lane dim and the
        # history's sublane dim layout-legal, and decouple tile VMEM from L.
        tl_cap = hist_buf_budget // (tb_align * din_pad * itemsize)
        tl = min(max(128, (tl_cap // 128) * 128), _round_up(L, 128))

    tb_max = rows_that_fit(tl)
    tb = B if B <= tb_max else max(tb_align, (tb_max // tb_align) * tb_align)
    return tb, tl


def _vmem_estimate(tb, tl, Din, hist_dtype, act_dtype, mask_dtype, w_dtype):
    """Rough resident-VMEM estimate: double-buffered inputs/outputs + scratch + temps."""
    din_pad = _round_up(Din, 128)
    tl_lane = _round_up(tl, 128)

    def tile2d(rows, cols, dtype):
        return _round_up(rows, _sublane_pack(dtype)) * cols * np.dtype(dtype).itemsize

    hist = (2 * tb * _round_up(tl, _sublane_pack(hist_dtype)) * din_pad
            * np.dtype(hist_dtype).itemsize)
    tgt_out = 4 * tile2d(tb, din_pad, act_dtype)                   # target + out, x2 buffers
    msk = 0 if mask_dtype is None else 2 * tile2d(tb, tl_lane, mask_dtype)
    wts = 2 * 2 * din_pad * din_pad * np.dtype(w_dtype).itemsize   # 2 weights, x2 buffers
    scratch = 2 * _round_up(tb, 8) * din_pad * 4                   # qp + ctx accumulators
    temps = (_round_up(tb, 8) * 8 * 2 * (tl_lane + din_pad) * 4    # scores/attn/ctx-chunk
             + tb * _round_up(tl, 8) * din_pad * 4)                # VPU-fallback product
    return hist + tgt_out + msk + wts + scratch + temps


# ---------------------------------------------------------------------------
# Kernel bodies
# ---------------------------------------------------------------------------
def _mhta_body(target_ref, history_ref, mask_ref, wqk_ref, wvo_ref, out_ref,
               qp_ref, ctx_ref, *, use_mxu):
    li = pl.program_id(1)

    @pl.when(li == 0)
    def _init():
        # Query projected through the folded Wq Wk^T / sqrt(A); cached for all L chunks.
        qp_ref[...] = jnp.dot(target_ref[...], wqk_ref[...],
                              preferred_element_type=jnp.float32)
        ctx_ref[...] = jnp.zeros_like(ctx_ref)

    hist = history_ref[...]                                   # (TB, TL, Din)

    if use_mxu:
        # Batched MXU matmuls (q-dim = 1): keeps the Din reduction off the XLU.
        q3 = qp_ref[...].astype(hist.dtype)[:, None, :]       # (TB, 1, Din)
        s = jnp.einsum('bqd,bkd->bqk', q3, hist,
                       preferred_element_type=jnp.float32)    # (TB, 1, TL) f32
        if mask_ref is not None:
            s = s * mask_ref[...].astype(jnp.float32)[:, None, :]
        attn = jnp.maximum(s, 0.0)                            # ReLU "attention"
        c = jnp.einsum('bqk,bkd->bqd', attn.astype(hist.dtype), hist,
                       preferred_element_type=jnp.float32)    # (TB, 1, Din) f32
        ctx_ref[...] += c[:, 0, :]
    else:
        # VPU fallback: broadcast-multiply + reduce (always lowers).
        qp = qp_ref[...]                                      # (TB, Din) f32
        s = jnp.sum(qp[:, None, :] * hist, axis=-1)           # (TB, TL) f32
        if mask_ref is not None:
            s = s * mask_ref[...].astype(jnp.float32)
        attn = jnp.maximum(s, 0.0)
        ctx_ref[...] += jnp.sum(attn[:, :, None] * hist, axis=1)

    @pl.when(li == pl.num_programs(1) - 1)
    def _finalize():
        wvo = wvo_ref[...]
        out = jnp.dot(ctx_ref[...].astype(wvo.dtype), wvo,
                      preferred_element_type=jnp.float32)     # folded Wv Wo
        out_ref[...] = (out + target_ref[...].astype(jnp.float32)).astype(out_ref.dtype)


def _make_kernel(masked, use_mxu):
    if masked:
        def kernel(target_ref, history_ref, mask_ref, wqk_ref, wvo_ref, out_ref,
                   qp_ref, ctx_ref):
            _mhta_body(target_ref, history_ref, mask_ref, wqk_ref, wvo_ref, out_ref,
                       qp_ref, ctx_ref, use_mxu=use_mxu)
    else:
        def kernel(target_ref, history_ref, wqk_ref, wvo_ref, out_ref,
                   qp_ref, ctx_ref):
            _mhta_body(target_ref, history_ref, None, wqk_ref, wvo_ref, out_ref,
                       qp_ref, ctx_ref, use_mxu=use_mxu)
    return kernel


# ---------------------------------------------------------------------------
# Wrapper
# ---------------------------------------------------------------------------
def multi_head_target_attention(target_item, history_sequence, params, mask=None,
                                use_scale=True, block_b=None, block_l=None,
                                vmem_budget_bytes=None):
    """Pallas implementation of MultiHeadTargetAttention.forward.

    target_item: (B, Din), history_sequence: (B, L, Din), mask: (B, L) or None.
    params: W_q/W_k/W_v stored (Din, A); W_o stored (A, Din)  (i.e. `x @ W` layout).
    """
    B, Din = target_item.shape
    _, L, _ = history_sequence.shape
    A = params['W_q'].shape[1]
    out_dtype = target_item.dtype

    # ---- one-time weight folding (scale folded into Wqk) ----
    scale = jnp.float32(A ** 0.5) if use_scale else jnp.float32(1.0)
    wqk = (params['W_q'].astype(jnp.float32) @ params['W_k'].astype(jnp.float32).T) / scale
    wvo = params['W_v'].astype(jnp.float32) @ params['W_o'].astype(jnp.float32)
    if out_dtype == jnp.bfloat16:                       # bf16 activations -> bf16 weights
        wqk, wvo = wqk.astype(jnp.bfloat16), wvo.astype(jnp.bfloat16)

    if mask is not None and mask.dtype == jnp.bool_:
        mask = mask.astype(jnp.int8)                    # narrow DMA; cast to f32 in-kernel

    # ---- per-generation VMEM budgeting & tiling ----
    phys_vmem = _physical_vmem_bytes()
    if vmem_budget_bytes is None:
        vmem_budget_bytes = min(int(phys_vmem * 0.70), 96 * 1024 * 1024)
    tb_align = max(_sublane_pack(out_dtype), _sublane_pack(history_sequence.dtype))
    tb, tl = _choose_tiles(B, L, Din, history_sequence.dtype, tb_align, vmem_budget_bytes)
    if block_b is not None:
        tb = block_b
    if block_l is not None:
        tl = block_l

    nb = pl.cdiv(B, tb)
    if nb > 1 and nb % 2 == 1:
        nb += 1                                         # even block count -> both v7x TCs busy
    if nb > 1 and block_b is None:
        tb = _round_up(pl.cdiv(B, nb), tb_align)        # rebalance to minimize padding
    nl = pl.cdiv(L, tl)
    b_pad, l_pad = nb * tb, nl * tl

    # Zero padding is exact: padded history rows / zero mask entries give relu(0)=0 and
    # contribute nothing; padded batch rows are sliced off at the end.
    if b_pad != B or l_pad != L:
        target_item = jnp.pad(target_item, ((0, b_pad - B), (0, 0)))
        history_sequence = jnp.pad(history_sequence,
                                   ((0, b_pad - B), (0, l_pad - L), (0, 0)))
        if mask is not None:
            mask = jnp.pad(mask, ((0, b_pad - B), (0, l_pad - L)))

    vec_spec = pl.BlockSpec((tb, Din), lambda i, l: (i, 0))
    hist_spec = pl.BlockSpec((tb, tl, Din), lambda i, l: (i, l, 0))
    w_spec = pl.BlockSpec((Din, Din), lambda i, l: (0, 0))          # grid-constant
    out_spec = pl.BlockSpec((tb, Din), lambda i, l: (i, 0))

    if mask is None:
        in_specs = [vec_spec, hist_spec, w_spec, w_spec]
        args = (target_item, history_sequence, wqk, wvo)
        mask_dtype = None
    else:
        mask_spec = pl.BlockSpec((tb, tl), lambda i, l: (i, l))
        in_specs = [vec_spec, hist_spec, mask_spec, w_spec, w_spec]
        args = (target_item, history_sequence, mask, wqk, wvo)
        mask_dtype = mask.dtype

    grid_spec = pltpu.PrefetchScalarGridSpec(
        num_scalar_prefetch=0,
        grid=(b_pad // tb, l_pad // tl),
        in_specs=in_specs,
        out_specs=out_spec,
        scratch_shapes=[pltpu.VMEM((tb, Din), jnp.float32),   # qp = x (Wq Wk^T / sqrt(A))
                        pltpu.VMEM((tb, Din), jnp.float32)],  # ctx accumulator
    )

    est = _vmem_estimate(tb, tl, Din, history_sequence.dtype, out_dtype, mask_dtype, wqk.dtype)
    vmem_limit = int(min(max(est + (8 << 20), 32 << 20), phys_vmem))

    h_it = np.dtype(history_sequence.dtype).itemsize
    t_it = np.dtype(out_dtype).itemsize
    m_bytes = 0 if mask_dtype is None else b_pad * l_pad * np.dtype(mask_dtype).itemsize
    cost = pl.CostEstimate(
        flops=4 * b_pad * l_pad * Din + 4 * b_pad * Din * Din,
        transcendentals=0,
        bytes_accessed=(b_pad * l_pad * Din * h_it          # history stream (the roofline)
                        + 2 * b_pad * Din * t_it            # target in + out
                        + 2 * Din * Din * np.dtype(wqk.dtype).itemsize
                        + m_bytes),
    )
    compiler_params = pltpu.CompilerParams(
        dimension_semantics=("parallel", "arbitrary"),
        vmem_limit_bytes=vmem_limit,
    )

    def _run(use_mxu):
        kernel = _make_kernel(masked=mask is not None, use_mxu=use_mxu)
        return pl.pallas_call(
            kernel,
            out_shape=jax.ShapeDtypeStruct((b_pad, Din), out_dtype),
            grid_spec=grid_spec,
            compiler_params=compiler_params,
            cost_estimate=cost,
        )(*args)

    try:
        out = _run(use_mxu=True)        # batched-MXU path (preferred; keeps XLU free)
    except Exception:
        out = _run(use_mxu=False)       # VPU-reduce fallback for older Mosaic lowerings
    return out[:B]


# ---------------------------------------------------------------------------
# Params / pure-JAX reference
# ---------------------------------------------------------------------------
def init_params(key, input_dim, attention_dim, dtype=jnp.float32):
    """Deterministic init mimicking nn.Linear(bias=False); stored as (in, out) for x @ W."""
    ks = jax.random.split(key, 4)

    def lin(k, fan_in, fan_out):
        bound = 1.0 / (fan_in ** 0.5)
        return jax.random.uniform(k, (fan_in, fan_out), dtype, -bound, bound)

    return {
        'W_q': lin(ks[0], input_dim, attention_dim),
        'W_k': lin(ks[1], input_dim, attention_dim),
        'W_v': lin(ks[2], input_dim, attention_dim),
        'W_o': lin(ks[3], attention_dim, input_dim),
    }


def _reference(target_item, history_sequence, params, mask, use_scale=True):
    """Pure-JAX reference matching the torch forward pass (un-folded weights)."""
    A = params['W_q'].shape[1]
    q = target_item @ params['W_q']                      # (B, A)
    k = history_sequence @ params['W_k']                 # (B, L, A)
    v = history_sequence @ params['W_v']                 # (B, L, A)
    scores = jnp.einsum('ba,bla->bl', q, k)
    if use_scale:
        scores = scores / (A ** 0.5)
    if mask is not None:
        scores = scores * mask
    attn = jnp.maximum(scores, 0.0)
    ctx = jnp.einsum('bl,bla->ba', attn, v)
    return ctx @ params['W_o'] + target_item


if __name__ == "__main__":
    B, L = 2, 8
    input_dim, attention_dim = 32, 32

    key = jax.random.PRNGKey(0)
    k_t, k_h, k_m, k_p = jax.random.split(key, 4)

    target_item = jax.random.normal(k_t, (B, input_dim), jnp.float32)
    history_sequence = jax.random.normal(k_h, (B, L, input_dim), jnp.float32)
    mask = (jax.random.uniform(k_m, (B, L)) > 0.3).astype(jnp.float32)
    params = init_params(k_p, input_dim, attention_dim)

    # Masked path.
    out = multi_head_target_attention(target_item, history_sequence, params,
                                      mask=mask, use_scale=True)
    out = jax.block_until_ready(out)
    ref = _reference(target_item, history_sequence, params, mask, use_scale=True)
    assert out.shape == (B, input_dim)
    # Weight folding reorders fp32 contractions -> slightly loosened tolerance.
    assert jnp.allclose(out, ref, atol=2e-4, rtol=2e-3), \
        f"masked mismatch, max abs err = {float(jnp.max(jnp.abs(out - ref)))}"

    # No-mask path (separately compiled variant, no dummy mask DMA).
    out_nm = multi_head_target_attention(target_item, history_sequence, params,
                                         mask=None, use_scale=True)
    out_nm = jax.block_until_ready(out_nm)
    ref_nm = _reference(target_item, history_sequence, params, None, use_scale=True)
    assert jnp.allclose(out_nm, ref_nm, atol=2e-4, rtol=2e-3), \
        f"no-mask mismatch, max abs err = {float(jnp.max(jnp.abs(out_nm - ref_nm)))}"

    print("KERNEL_OK")
</pallas_src>

<mosaic_0001>
module attributes {stable_mosaic.version = 11 : i64} {
  func.func @kernel(%arg0: i32, %arg1: i32, %arg2: memref<2x32xf32, #tpu.memory_space<vmem>>, %arg3: memref<2x8x32xf32, #tpu.memory_space<vmem>>, %arg4: memref<2x8xf32, #tpu.memory_space<vmem>>, %arg5: memref<32x32xf32, #tpu.memory_space<vmem>>, %arg6: memref<32x32xf32, #tpu.memory_space<vmem>>, %arg7: memref<2x32xf32, #tpu.memory_space<vmem>>, %arg8: memref<2x32xf32, #tpu.memory_space<vmem>>, %arg9: memref<2x32xf32, #tpu.memory_space<vmem>>) attributes {dimension_semantics = [#tpu.dimension_semantics<parallel>, #tpu.dimension_semantics<arbitrary>], iteration_bounds = array<i64: 1, 1>, scalar_prefetch = 0 : i64, scratch_operands = 2 : i64, tpu.core_type = #tpu.core_type<tc>, window_params = [{transform_indices = @transform_0, window_bounds = array<i64: 2, 32>}, {transform_indices = @transform_1, window_bounds = array<i64: 2, 8, 32>}, {transform_indices = @transform_2, window_bounds = array<i64: 2, 8>}, {pipeline_mode = #tpu.pipeline_mode<synchronous>, transform_indices = @transform_3, window_bounds = array<i64: 32, 32>}, {pipeline_mode = #tpu.pipeline_mode<synchronous>, transform_indices = @transform_4, window_bounds = array<i64: 32, 32>}, {transform_indices = @transform_5, window_bounds = array<i64: 2, 32>}]} {
    %c0_i32 = arith.constant 0 : i32
    %0 = arith.cmpi eq, %arg1, %c0_i32 : i32
    %1 = arith.extui %0 : i1 to i32
    %c0_i32_0 = arith.constant 0 : i32
    %2 = arith.cmpi ne, %1, %c0_i32_0 : i32
    scf.if %2 {
      %c0_15 = arith.constant 0 : index
      %c0_16 = arith.constant 0 : index
      %20 = vector.load %arg2[%c0_15, %c0_16] : memref<2x32xf32, #tpu.memory_space<vmem>>, vector<2x32xf32>
      %c0_17 = arith.constant 0 : index
      %c0_18 = arith.constant 0 : index
      %21 = vector.load %arg5[%c0_17, %c0_18] : memref<32x32xf32, #tpu.memory_space<vmem>>, vector<32x32xf32>
      %cst_19 = arith.constant dense<0.000000e+00> : vector<2x32xf32>
      %22 = tpu.matmul %20, %21, %cst_19 {dimension_numbers = #tpu.dot_dimension_numbers<[1], [0], [0], [1], [0, 0, 1, 1], [], []>} : vector<2x32xf32>, vector<32x32xf32>, vector<2x32xf32> -> vector<2x32xf32>
      %c0_20 = arith.constant 0 : index
      %c0_21 = arith.constant 0 : index
      %23 = vector.load %arg8[%c0_20, %c0_21] : memref<2x32xf32, #tpu.memory_space<vmem>>, vector<2x32xf32>
      tpu.vector_store %arg8[%c0_20, %c0_21], %22 {strides = array<i32>} : memref<2x32xf32, #tpu.memory_space<vmem>>, vector<2x32xf32>,
      %cst_22 = arith.constant 0.000000e+00 : f32
      %24 = vector.broadcast %cst_22 : f32 to vector<2x32xf32>
      %c0_23 = arith.constant 0 : index
      %c0_24 = arith.constant 0 : index
      %25 = vector.load %arg9[%c0_23, %c0_24] : memref<2x32xf32, #tpu.memory_space<vmem>>, vector<2x32xf32>
      tpu.vector_store %arg9[%c0_23, %c0_24], %24 {strides = array<i32>} : memref<2x32xf32, #tpu.memory_space<vmem>>, vector<2x32xf32>,
    } else {
    }
    %c0 = arith.constant 0 : index
    %c0_1 = arith.constant 0 : index
    %c0_2 = arith.constant 0 : index
    %3 = vector.load %arg3[%c0, %c0_1, %c0_2] : memref<2x8x32xf32, #tpu.memory_space<vmem>>, vector<2x8x32xf32>
    %c0_3 = arith.constant 0 : index
    %c0_4 = arith.constant 0 : index
    %4 = vector.load %arg8[%c0_3, %c0_4] : memref<2x32xf32, #tpu.memory_space<vmem>>, vector<2x32xf32>
    %5 = vector.shape_cast %4 : vector<2x32xf32> to vector<2x1x32xf32>
    "tpu.trace_start"() <{level = 10 : i32, message = "bqd,bkd->bqk"}> : () -> ()
    %cst = arith.constant dense<0.000000e+00> : vector<2x1x8xf32>
    %6 = tpu.matmul %5, %3, %cst {dimension_numbers = #tpu.dot_dimension_numbers<[2], [2], [1], [1], [0, 0, 0, 1, 1, 1], [0], [0]>} : vector<2x1x32xf32>, vector<2x8x32xf32>, vector<2x1x8xf32> -> vector<2x1x8xf32>
    "tpu.trace_stop"() : () -> ()
    %c0_5 = arith.constant 0 : index
    %c0_6 = arith.constant 0 : index
    %7 = vector.load %arg4[%c0_5, %c0_6] : memref<2x8xf32, #tpu.memory_space<vmem>>, vector<2x8xf32>
    %8 = vector.shape_cast %7 : vector<2x8xf32> to vector<2x1x8xf32>
    %9 = arith.mulf %6, %8 : vector<2x1x8xf32>
    %cst_7 = arith.constant 0.000000e+00 : f32
    %10 = vector.broadcast %cst_7 : f32 to vector<2x1x8xf32>
    %11 = arith.maximumf %9, %10 : vector<2x1x8xf32>
    "tpu.trace_start"() <{level = 10 : i32, message = "bqk,bkd->bqd"}> : () -> ()
    %cst_8 = arith.constant dense<0.000000e+00> : vector<2x1x32xf32>
    %12 = tpu.matmul %11, %3, %cst_8 {dimension_numbers = #tpu.dot_dimension_numbers<[2], [1], [1], [2], [0, 0, 0, 1, 1, 2], [0], [0]>} : vector<2x1x8xf32>, vector<2x8x32xf32>, vector<2x1x32xf32> -> vector<2x1x32xf32>
    "tpu.trace_stop"() : () -> ()
    %c0_9 = arith.constant 0 : index
    %c0_10 = arith.constant 0 : index
    %13 = vector.load %arg9[%c0_9, %c0_10] : memref<2x32xf32, #tpu.memory_space<vmem>>, vector<2x32xf32>
    %14 = vector.shape_cast %12 : vector<2x1x32xf32> to vector<2x32xf32>
    %15 = arith.addf %13, %14 : vector<2x32xf32>
    %c0_11 = arith.constant 0 : index
    %c0_12 = arith.constant 0 : index
    %16 = vector.load %arg9[%c0_11, %c0_12] : memref<2x32xf32, #tpu.memory_space<vmem>>, vector<2x32xf32>
    tpu.vector_store %arg9[%c0_11, %c0_12], %15 {strides = array<i32>} : memref<2x32xf32, #tpu.memory_space<vmem>>, vector<2x32xf32>,
    %c0_i32_13 = arith.constant 0 : i32
    %17 = arith.cmpi eq, %arg1, %c0_i32_13 : i32
    %18 = arith.extui %17 : i1 to i32
    %c0_i32_14 = arith.constant 0 : i32
    %19 = arith.cmpi ne, %18, %c0_i32_14 : i32
    scf.if %19 {
      %c0_15 = arith.constant 0 : index
      %c0_16 = arith.constant 0 : index
      %20 = vector.load %arg6[%c0_15, %c0_16] : memref<32x32xf32, #tpu.memory_space<vmem>>, vector<32x32xf32>
      %c0_17 = arith.constant 0 : index
      %c0_18 = arith.constant 0 : index
      %21 = vector.load %arg9[%c0_17, %c0_18] : memref<2x32xf32, #tpu.memory_space<vmem>>, vector<2x32xf32>
      %cst_19 = arith.constant dense<0.000000e+00> : vector<2x32xf32>
      %22 = tpu.matmul %21, %20, %cst_19 {dimension_numbers = #tpu.dot_dimension_numbers<[1], [0], [0], [1], [0, 0, 1, 1], [], []>} : vector<2x32xf32>, vector<32x32xf32>, vector<2x32xf32> -> vector<2x32xf32>
      %c0_20 = arith.constant 0 : index
      %c0_21 = arith.constant 0 : index
      %23 = vector.load %arg2[%c0_20, %c0_21] : memref<2x32xf32, #tpu.memory_space<vmem>>, vector<2x32xf32>
      %24 = arith.addf %22, %23 : vector<2x32xf32>
      %c0_22 = arith.constant 0 : index
      %c0_23 = arith.constant 0 : index
      %25 = vector.load %arg7[%c0_22, %c0_23] : memref<2x32xf32, #tpu.memory_space<vmem>>, vector<2x32xf32>
      tpu.vector_store %arg7[%c0_22, %c0_23], %24 {strides = array<i32>} : memref<2x32xf32, #tpu.memory_space<vmem>>, vector<2x32xf32>,
    } else {
    }
    return
  }
  func.func @transform_0(%arg0: i32, %arg1: i32) -> (i32, i32) {
    %c0_i32 = arith.constant 0 : i32
    %c0_i32_0 = arith.constant 0 : i32
    return %arg0, %c0_i32 : i32, i32
  }
  func.func @transform_1(%arg0: i32, %arg1: i32) -> (i32, i32, i32) {
    %c0_i32 = arith.constant 0 : i32
    %c0_i32_0 = arith.constant 0 : i32
    return %arg0, %arg1, %c0_i32 : i32, i32, i32
  }
  func.func @transform_2(%arg0: i32, %arg1: i32) -> (i32, i32) {
    %c0_i32 = arith.constant 0 : i32
    return %arg0, %arg1 : i32, i32
  }
  func.func @transform_3(%arg0: i32, %arg1: i32) -> (i32, i32) {
    %c0_i32 = arith.constant 0 : i32
    %c0_i32_0 = arith.constant 0 : i32
    %c0_i32_1 = arith.constant 0 : i32
    return %c0_i32, %c0_i32_0 : i32, i32
  }
  func.func @transform_4(%arg0: i32, %arg1: i32) -> (i32, i32) {
    %c0_i32 = arith.constant 0 : i32
    %c0_i32_0 = arith.constant 0 : i32
    %c0_i32_1 = arith.constant 0 : i32
    return %c0_i32, %c0_i32_0 : i32, i32
  }
  func.func @transform_5(%arg0: i32, %arg1: i32) -> (i32, i32) {
    %c0_i32 = arith.constant 0 : i32
    %c0_i32_0 = arith.constant 0 : i32
    return %arg0, %c0_i32 : i32, i32
  }
}

module attributes {stable_mosaic.version = 11 : i64} {
  func.func @kernel(%arg0: i32, %arg1: i32, %arg2: memref<2x32xf32, #tpu.memory_space<vmem>>, %arg3: memref<2x8x32xf32, #tpu.memory_space<vmem>>, %arg4: memref<2x8xf32, #tpu.memory_space<vmem>>, %arg5: memref<32x32xf32, #tpu.memory_space<vmem>>, %arg6: memref<32x32xf32, #tpu.memory_space<vmem>>, %arg7: memref<2x32xf32, #tpu.memory_space<vmem>>, %arg8: memref<2x32xf32, #tpu.memory_space<vmem>>, %arg9: memref<2x32xf32, #tpu.memory_space<vmem>>) attributes {dimension_semantics = [#tpu.dimension_semantics<parallel>, #tpu.dimension_semantics<arbitrary>], iteration_bounds = array<i64: 1, 1>, scalar_prefetch = 0 : i64, scratch_operands = 2 : i64, tpu.core_type = #tpu.core_type<tc>, window_params = [{transform_indices = @transform_0, window_bounds = array<i64: 2, 32>}, {transform_indices = @transform_1, window_bounds = array<i64: 2, 8, 32>}, {transform_indices = @transform_2, window_bounds = array<i64: 2, 8>}, {pipeline_mode = #tpu.pipeline_mode<synchronous>, transform_indices = @transform_3, window_bounds = array<i64: 32, 32>}, {pipeline_mode = #tpu.pipeline_mode<synchronous>, transform_indices = @transform_4, window_bounds = array<i64: 32, 32>}, {transform_indices = @transform_5, window_bounds = array<i64: 2, 32>}]} {
    %c0_i32 = arith.constant 0 : i32
    %0 = arith.cmpi eq, %arg1, %c0_i32 : i32
    %1 = arith.extui %0 : i1 to i32
    %c0_i32_0 = arith.constant 0 : i32
    %2 = arith.cmpi ne, %1, %c0_i32_0 : i32
    scf.if %2 {
      %c0_15 = arith.constant 0 : index
      %c0_16 = arith.constant 0 : index
      %23 = vector.load %arg2[%c0_15, %c0_16] : memref<2x32xf32, #tpu.memory_space<vmem>>, vector<2x32xf32>
      %c0_17 = arith.constant 0 : index
      %c0_18 = arith.constant 0 : index
      %24 = vector.load %arg5[%c0_17, %c0_18] : memref<32x32xf32, #tpu.memory_space<vmem>>, vector<32x32xf32>
      %cst_19 = arith.constant dense<0.000000e+00> : vector<2x32xf32>
      %25 = tpu.matmul %23, %24, %cst_19 {dimension_numbers = #tpu.dot_dimension_numbers<[1], [0], [0], [1], [0, 0, 1, 1], [], []>} : vector<2x32xf32>, vector<32x32xf32>, vector<2x32xf32> -> vector<2x32xf32>
      %c0_20 = arith.constant 0 : index
      %c0_21 = arith.constant 0 : index
      %26 = vector.load %arg8[%c0_20, %c0_21] : memref<2x32xf32, #tpu.memory_space<vmem>>, vector<2x32xf32>
      tpu.vector_store %arg8[%c0_20, %c0_21], %25 {strides = array<i32>} : memref<2x32xf32, #tpu.memory_space<vmem>>, vector<2x32xf32>,
      %cst_22 = arith.constant 0.000000e+00 : f32
      %27 = vector.broadcast %cst_22 : f32 to vector<2x32xf32>
      %c0_23 = arith.constant 0 : index
      %c0_24 = arith.constant 0 : index
      %28 = vector.load %arg9[%c0_23, %c0_24] : memref<2x32xf32, #tpu.memory_space<vmem>>, vector<2x32xf32>
      tpu.vector_store %arg9[%c0_23, %c0_24], %27 {strides = array<i32>} : memref<2x32xf32, #tpu.memory_space<vmem>>, vector<2x32xf32>,
    } else {
    }
    %c0 = arith.constant 0 : index
    %c0_1 = arith.constant 0 : index
    %c0_2 = arith.constant 0 : index
    %3 = vector.load %arg3[%c0, %c0_1, %c0_2] : memref<2x8x32xf32, #tpu.memory_space<vmem>>, vector<2x8x32xf32>
    %c0_3 = arith.constant 0 : index
    %c0_4 = arith.constant 0 : index
    %4 = vector.load %arg8[%c0_3, %c0_4] : memref<2x32xf32, #tpu.memory_space<vmem>>, vector<2x32xf32>
    %5 = vector.shape_cast %4 : vector<2x32xf32> to vector<2x1x32xf32>
    %6 = vector.broadcast %5 : vector<2x1x32xf32> to vector<2x8x32xf32>
    %7 = arith.mulf %6, %3 : vector<2x8x32xf32>
    %cst = arith.constant dense<0.000000e+00> : vector<2x8xf32>
    %8 = vector.multi_reduction <add>, %7, %cst [2] : vector<2x8x32xf32> to vector<2x8xf32>
    %c0_5 = arith.constant 0 : index
    %c0_6 = arith.constant 0 : index
    %9 = vector.load %arg4[%c0_5, %c0_6] : memref<2x8xf32, #tpu.memory_space<vmem>>, vector<2x8xf32>
    %10 = arith.mulf %8, %9 : vector<2x8xf32>
    %cst_7 = arith.constant 0.000000e+00 : f32
    %11 = vector.broadcast %cst_7 : f32 to vector<2x8xf32>
    %12 = arith.maximumf %10, %11 : vector<2x8xf32>
    %c0_8 = arith.constant 0 : index
    %c0_9 = arith.constant 0 : index
    %13 = vector.load %arg9[%c0_8, %c0_9] : memref<2x32xf32, #tpu.memory_space<vmem>>, vector<2x32xf32>
    %14 = vector.shape_cast %12 : vector<2x8xf32> to vector<2x8x1xf32>
    %15 = vector.broadcast %14 : vector<2x8x1xf32> to vector<2x8x32xf32>
    %16 = arith.mulf %15, %3 : vector<2x8x32xf32>
    %cst_10 = arith.constant dense<0.000000e+00> : vector<2x32xf32>
    %17 = vector.multi_reduction <add>, %16, %cst_10 [1] : vector<2x8x32xf32> to vector<2x32xf32>
    %18 = arith.addf %13, %17 : vector<2x32xf32>
    %c0_11 = arith.constant 0 : index
    %c0_12 = arith.constant 0 : index
    %19 = vector.load %arg9[%c0_11, %c0_12] : memref<2x32xf32, #tpu.memory_space<vmem>>, vector<2x32xf32>
    tpu.vector_store %arg9[%c0_11, %c0_12], %18 {strides = array<i32>} : memref<2x32xf32, #tpu.memory_space<vmem>>, vector<2x32xf32>,
    %c0_i32_13 = arith.constant 0 : i32
    %20 = arith.cmpi eq, %arg1, %c0_i32_13 : i32
    %21 = arith.extui %20 : i1 to i32
    %c0_i32_14 = arith.constant 0 : i32
    %22 = arith.cmpi ne, %21, %c0_i32_14 : i32
    scf.if %22 {
      %c0_15 = arith.constant 0 : index
      %c0_16 = arith.constant 0 : index
      %23 = vector.load %arg6[%c0_15, %c0_16] : memref<32x32xf32, #tpu.memory_space<vmem>>, vector<32x32xf32>
      %c0_17 = arith.constant 0 : index
      %c0_18 = arith.constant 0 : index
      %24 = vector.load %arg9[%c0_17, %c0_18] : memref<2x32xf32, #tpu.memory_space<vmem>>, vector<2x32xf32>
      %cst_19 = arith.constant dense<0.000000e+00> : vector<2x32xf32>
      %25 = tpu.matmul %24, %23, %cst_19 {dimension_numbers = #tpu.dot_dimension_numbers<[1], [0], [0], [1], [0, 0, 1, 1], [], []>} : vector<2x32xf32>, vector<32x32xf32>, vector<2x32xf32> -> vector<2x32xf32>
      %c0_20 = arith.constant 0 : index
      %c0_21 = arith.constant 0 : index
      %26 = vector.load %arg2[%c0_20, %c0_21] : memref<2x32xf32, #tpu.memory_space<vmem>>, vector<2x32xf32>
      %27 = arith.addf %25, %26 : vector<2x32xf32>
      %c0_22 = arith.constant 0 : index
      %c0_23 = arith.constant 0 : index
      %28 = vector.load %arg7[%c0_22, %c0_23] : memref<2x32xf32, #tpu.memory_space<vmem>>, vector<2x32xf32>
      tpu.vector_store %arg7[%c0_22, %c0_23], %27 {strides = array<i32>} : memref<2x32xf32, #tpu.memory_space<vmem>>, vector<2x32xf32>,
    } else {
    }
    return
  }
  func.func @transform_0(%arg0: i32, %arg1: i32) -> (i32, i32) {
    %c0_i32 = arith.constant 0 : i32
    %c0_i32_0 = arith.constant 0 : i32
    return %arg0, %c0_i32 : i32, i32
  }
  func.func @transform_1(%arg0: i32, %arg1: i32) -> (i32, i32, i32) {
    %c0_i32 = arith.constant 0 : i32
    %c0_i32_0 = arith.constant 0 : i32
    return %arg0, %arg1, %c0_i32 : i32, i32, i32
  }
  func.func @transform_2(%arg0: i32, %arg1: i32) -> (i32, i32) {
    %c0_i32 = arith.constant 0 : i32
    return %arg0, %arg1 : i32, i32
  }
  func.func @transform_3(%arg0: i32, %arg1: i32) -> (i32, i32) {
    %c0_i32 = arith.constant 0 : i32
    %c0_i32_0 = arith.constant 0 : i32
    %c0_i32_1 = arith.constant 0 : i32
    return %c0_i32, %c0_i32_0 : i32, i32
  }
  func.func @transform_4(%arg0: i32, %arg1: i32) -> (i32, i32) {
    %c0_i32 = arith.constant 0 : i32
    %c0_i32_0 = arith.constant 0 : i32
    %c0_i32_1 = arith.constant 0 : i32
    return %c0_i32, %c0_i32_0 : i32, i32
  }
  func.func @transform_5(%arg0: i32, %arg1: i32) -> (i32, i32) {
    %c0_i32 = arith.constant 0 : i32
    %c0_i32_0 = arith.constant 0 : i32
    return %arg0, %c0_i32 : i32, i32
  }
}

</mosaic_0001>

<llo_original>
// kernel: tpu_custom_call.1
$region0: #{tpu_custom_call.1}
  #allocation0 [shape = 'u32[]', space=smem, size = 0x4, offset = 0x4, fixed_abs, tag = 'smem constant byte address 0x4 - core index']
  #allocation1 [shape = 'u32[72,128]{1,0:T(1,128)}', space=vmem, size = 0x9000, scoped, tag = 'internal scratch']
  #allocation2 [shape = 'f32[2,32]{1,0:T(2,128)}', space=vmem, size = 0x400, scoped, tag = 'scratch operand']
  #allocation3 [shape = 'f32[2,32]{1,0:T(2,128)}', space=vmem, size = 0x400, scoped, tag = 'scratch operand']
  %s0 = inlined_call_operand.hbm [shape: f32[2,32], index: 0, kind: input, shape index: {}]
  %s1 = inlined_call_operand.hbm [shape: f32[2,8,32], index: 1, kind: input, shape index: {}]
  %s2 = inlined_call_operand.hbm [shape: f32[2,8], index: 2, kind: input, shape index: {}]
  %s3 = inlined_call_operand.hbm [shape: f32[32,32], index: 3, kind: input, shape index: {}]
  %s4 = inlined_call_operand.hbm [shape: f32[32,32], index: 4, kind: input, shape index: {}]
  %s5 = inlined_call_operand.hbm [shape: f32[2,32], index: 5, kind: output, shape index: {}]
  %s6 = sld [smem:[#allocation0]]
  $region58: #{tpu_custom_call.1} parent=0
    _
  %s8 = ssub.s32 1, %s6
  %s9 = scalar_select 0, %s8, %s6
  $region1: #{tpu_custom_call.1} parent=0
    #allocation4 [shape = 'u8[1024]{0}', space=vmem, size = 0x400, scoped, tag = 'input window, operand 0, single buffered']
    #allocation5 [shape = 's32[1]{0}', space=sflag, size = 0x4, scoped, tag = 'scoped memory for tpu_custom_call.1']
    #allocation6 [shape = 's32[1]{0}', space=sflag, size = 0x4, scoped, tag = 'scoped memory for tpu_custom_call.1']
    #allocation7 [shape = 'u8[8192]{0}', space=vmem, size = 0x2000, scoped, tag = 'input window, operand 1, single buffered']
    #allocation8 [shape = 's32[1]{0}', space=sflag, size = 0x4, scoped, tag = 'scoped memory for tpu_custom_call.1']
    #allocation9 [shape = 'u8[1024]{0}', space=vmem, size = 0x400, scoped, tag = 'input window, operand 2, single buffered']
    #allocation10 [shape = 'u8[16384]{0}', space=vmem, size = 0x4000, scoped, tag = 'input window, operand 3, single buffered']
    #allocation11 [shape = 's32[1]{0}', space=sflag, size = 0x4, scoped, tag = 'scoped memory for tpu_custom_call.1']
    #allocation12 [shape = 'u8[16384]{0}', space=vmem, size = 0x4000, scoped, tag = 'input window, operand 4, single buffered']
    #allocation13 [shape = 'u8[1024]{0}', space=vmem, size = 0x400, scoped, tag = 'output window, operand 0, single buffered']
    %10 = vsyncpa [#allocation5], 0
    %11 = vsyncpa [#allocation8], 0
    %12 = vsyncpa [#allocation11], 0
    %13 = vsyncpa [#allocation6], 0
    // Predicated region
    $region2: #{tpu_custom_call.1} parent=1 // pred_check
      _
    $region3: #{tpu_custom_call.1} parent=1 // pred_check_branch
      %15 = sbr.rel (0) target = $region5
    $region4: #{tpu_custom_call.1} parent=1 // pred_region
      %17 = vsyncadd [#allocation5], 0
      %s19 = sshll.u32 %s0, 4
      %s20 = int_to_ptr.hbm [resolvable:$true] %s19
      %s21 = sshll.u32 [#allocation4], 4
      %s22 = int_to_ptr.vmem [resolvable:$true] %s21
      %24 = dma.hbm_to_vmem [thread:$0]  %s20, 32, %s22, [#allocation5]
    $region5: #{tpu_custom_call.1} parent=1 // pred_fallthru
      _
    // Predicated region
    $region6: #{tpu_custom_call.1} parent=1 // pred_check
      _
    $region7: #{tpu_custom_call.1} parent=1 // pred_check_branch
      %26 = sbr.rel (0) target = $region9
    $region8: #{tpu_custom_call.1} parent=1 // pred_region
      %28 = vsyncadd [#allocation8], 0
      %s29 = sshll.u32 %s1, 4
      %s30 = int_to_ptr.hbm [resolvable:$true] %s29
      %s31 = sshll.u32 [#allocation7], 4
      %s32 = int_to_ptr.vmem [resolvable:$true] %s31
      %37 = dma.hbm_to_vmem [thread:$0]  %s30, 256, %s32, [#allocation8], 128, 128, 8
    $region9: #{tpu_custom_call.1} parent=1 // pred_fallthru
      _
    // Predicated region
    $region10: #{tpu_custom_call.1} parent=1 // pred_check
      _
    $region11: #{tpu_custom_call.1} parent=1 // pred_check_branch
      %39 = sbr.rel (0) target = $region13
    $region12: #{tpu_custom_call.1} parent=1 // pred_region
      %41 = vsyncadd [#allocation8], 0
      %s43 = sshll.u32 %s2, 4
      %s44 = int_to_ptr.hbm [resolvable:$true] %s43
      %s45 = sshll.u32 [#allocation9], 4
      %s46 = int_to_ptr.vmem [resolvable:$true] %s45
      %48 = dma.hbm_to_vmem [thread:$0]  %s44, 32, %s46, [#allocation8]
    $region13: #{tpu_custom_call.1} parent=1 // pred_fallthru
      _
    // Predicated region
    $region14: #{tpu_custom_call.1} parent=1 // pred_check
      _
    $region15: #{tpu_custom_call.1} parent=1 // pred_check_branch
      %50 = sbr.rel (0) target = $region17
    $region16: #{tpu_custom_call.1} parent=1 // pred_region
      %52 = vsyncadd [#allocation11], 0
      %s53 = sshll.u32 %s3, 4
      %s54 = int_to_ptr.hbm [resolvable:$true] %s53
      %s55 = sshll.u32 [#allocation10], 4
      %s56 = int_to_ptr.vmem [resolvable:$true] %s55
      %61 = dma.hbm_to_vmem [thread:$0]  %s54, 512, %s56, [#allocation11], 128, 128, 8
    $region17: #{tpu_custom_call.1} parent=1 // pred_fallthru
      _
    // Predicated region
    $region18: #{tpu_custom_call.1} parent=1 // pred_check
      _
    $region19: #{tpu_custom_call.1} parent=1 // pred_check_branch
      %63 = sbr.rel (0) target = $region21
    $region20: #{tpu_custom_call.1} parent=1 // pred_region
      %65 = vsyncadd [#allocation11], 0
      %s66 = sshll.u32 %s4, 4
      %s67 = int_to_ptr.hbm [resolvable:$true] %s66
      %s68 = sshll.u32 [#allocation12], 4
      %s69 = int_to_ptr.vmem [resolvable:$true] %s68
      %74 = dma.hbm_to_vmem [thread:$0]  %s67, 512, %s69, [#allocation11], 128, 128, 8
    $region21: #{tpu_custom_call.1} parent=1 // pred_fallthru
      _
    // Predicated region
    $region22: #{tpu_custom_call.1} parent=1 // pred_check
      _
    $region23: #{tpu_custom_call.1} parent=1 // pred_check_branch
      %76 = sbr.rel (0) target = $region25
    $region24: #{tpu_custom_call.1} parent=1 // pred_region
      %78 = dma.done [#allocation5], 32
    $region25: #{tpu_custom_call.1} parent=1 // pred_fallthru
      _
    // Predicated region
    $region26: #{tpu_custom_call.1} parent=1 // pred_check
      _
    $region27: #{tpu_custom_call.1} parent=1 // pred_check_branch
      %80 = sbr.rel (0) target = $region29
    $region28: #{tpu_custom_call.1} parent=1 // pred_region
      %82 = dma.done [#allocation8], 256
    $region29: #{tpu_custom_call.1} parent=1 // pred_fallthru
      _
    // Predicated region
    $region30: #{tpu_custom_call.1} parent=1 // pred_check
      _
    $region31: #{tpu_custom_call.1} parent=1 // pred_check_branch
      %84 = sbr.rel (0) target = $region33
    $region32: #{tpu_custom_call.1} parent=1 // pred_region
      %86 = dma.done [#allocation8], 32
    $region33: #{tpu_custom_call.1} parent=1 // pred_fallthru
      _
    // Predicated region
    $region34: #{tpu_custom_call.1} parent=1 // pred_check
      _
    $region35: #{tpu_custom_call.1} parent=1 // pred_check_branch
      %88 = sbr.rel (0) target = $region37
    $region36: #{tpu_custom_call.1} parent=1 // pred_region
      %90 = dma.done [#allocation11], 512
    $region37: #{tpu_custom_call.1} parent=1 // pred_fallthru
      _
    // Predicated region
    $region38: #{tpu_custom_call.1} parent=1 // pred_check
      _
    $region39: #{tpu_custom_call.1} parent=1 // pred_check_branch
      %92 = sbr.rel (0) target = $region41
    $region40: #{tpu_custom_call.1} parent=1 // pred_region
      %94 = dma.done [#allocation11], 512
    $region41: #{tpu_custom_call.1} parent=1 // pred_fallthru
      _
    %p95 = scmp.eq.s32.totalorder 0, 0
    // Predicated region
    $region42: #{tpu_custom_call.1} parent=1 // pred_check
      %p96 = pneg %p95
    $region43: #{tpu_custom_call.1} parent=1 // pred_check_branch
      %98 = sbr.rel (%p96) target = $region45
    $region44: #{tpu_custom_call.1} parent=1 // pred_region
      %v99 = vld [vmem:[#allocation4] sm:$0x3]
      %v100 = vld [vmem:[#allocation10] sm:$0xff]
      %v101 = vld [vmem:[#allocation10 + $0x8] sm:$0xff]
      %v102 = vld [vmem:[#allocation10 + $0x10] sm:$0xff]
      %v103 = vld [vmem:[#allocation10 + $0x18] sm:$0xff]
      %vm104 = vcmask 261120
      %v106 = vsel %vm104, %v99, 0
      %108 = vmatpush.msra.mxu0 0.0
      %109 = vmatpush.msra.mxu0 0.0
      %110 = vmatpush.msra.mxu0 0.0
      %111 = vmatpush.msra.mxu0 0.0
      %112 = vmatpush.msra.mxu0 0.0
      %113 = vmatpush.msra.mxu0 0.0
      %114 = vmatpush.msra.mxu0 0.0
      %115 = vmatpush.msra.mxu0 0.0
      %116 = vmatpush.msra.mxu0 0.0
      %117 = vmatpush.msra.mxu0 0.0
      %118 = vmatpush.msra.mxu0 0.0
      %119 = vmatpush.msra.mxu0 0.0
      %120 = vmatpush.msra.mxu0 %v103
      %121 = vmatpush.msra.mxu0 %v102
      %122 = vmatpush.msra.mxu0 %v101
      %123 = vmatpush.msra.mxu0 %v100
      %124 = vmatmul.f32.gmra.mxu0 %v106
      %v125 = vpop.f32.mrf.mxu0
      %v126 = vadd.f32 0.0, %v125
      %127 = vdwg.mxu0
      %vm128 = vcmask 254976
      %129 = vst.msk [vmem:[#allocation2] sm:$0x3] %vm128, %v126
      %130 = vst.msk [vmem:[#allocation3] sm:$0x3] %vm128, 0.0
    $region45: #{tpu_custom_call.1} parent=1 // pred_fallthru
      _
    %v131 = vld [vmem:[#allocation7] sm:$0xff]
    %v132 = vld [vmem:[#allocation7 + $0x8] sm:$0xff]
    %v133 = vld [vmem:[#allocation2] sm:$0x3]
    %v135 = vrot.slane %v133, 1
    %vm136 = vcmask 261120
    %v137 = vsel %vm136, %v133, 0
    %v140 = vsel %vm136, %v131, 0
    %142 = vmatpush.xpose.msra.mxu0 0.0
    %143 = vmatpush.xpose.msra.mxu0 0.0
    %144 = vmatpush.xpose.msra.mxu0 0.0
    %145 = vmatpush.xpose.msra.mxu0 0.0
    %146 = vmatpush.xpose.msra.mxu0 0.0
    %147 = vmatpush.xpose.msra.mxu0 0.0
    %148 = vmatpush.xpose.msra.mxu0 0.0
    %149 = vmatpush.xpose.msra.mxu0 0.0
    %150 = vmatpush.xpose.msra.mxu0 0.0
    %151 = vmatpush.xpose.msra.mxu0 0.0
    %152 = vmatpush.xpose.msra.mxu0 0.0
    %153 = vmatpush.xpose.msra.mxu0 0.0
    %154 = vmatpush.xpose.msra.mxu0 0.0
    %155 = vmatpush.xpose.msra.mxu0 0.0
    %156 = vmatpush.xpose.msra.mxu0 0.0
    %157 = vmatpush.xpose.msra.mxu0 %v140
    %158 = vmatmul.f32.gmra.mxu0 %v137
    %v159 = vpop.f32.mrf.mxu0
    %v160 = vadd.f32 0.0, %v159
    %161 = vdwg.mxu0
    %v162 = vsel %vm136, %v135, 0
    %v165 = vsel %vm136, %v132, 0
    %167 = vmatpush.xpose.msra.mxu0 0.0
    %168 = vmatpush.xpose.msra.mxu0 0.0
    %169 = vmatpush.xpose.msra.mxu0 0.0
    %170 = vmatpush.xpose.msra.mxu0 0.0
    %171 = vmatpush.xpose.msra.mxu0 0.0
    %172 = vmatpush.xpose.msra.mxu0 0.0
    %173 = vmatpush.xpose.msra.mxu0 0.0
    %174 = vmatpush.xpose.msra.mxu0 0.0
    %175 = vmatpush.xpose.msra.mxu0 0.0
    %176 = vmatpush.xpose.msra.mxu0 0.0
    %177 = vmatpush.xpose.msra.mxu0 0.0
    %178 = vmatpush.xpose.msra.mxu0 0.0
    %179 = vmatpush.xpose.msra.mxu0 0.0
    %180 = vmatpush.xpose.msra.mxu0 0.0
    %181 = vmatpush.xpose.msra.mxu0 0.0
    %182 = vmatpush.xpose.msra.mxu0 %v165
    %183 = vmatmul.f32.gmra.mxu0 %v162
    %v184 = vpop.f32.mrf.mxu0
    %v185 = vadd.f32 0.0, %v184
    %186 = vdwg.mxu0
    %v187 = vld [vmem:[#allocation9] sm:$0x3]
    %v189 = vrot.slane %v187, 1
    %v191 = vmul.f32 %v160, %v187
    %v192 = vmul.f32 %v185, %v189
    %v193 = vmax.f32 %v191, 0.0
    %v194 = vmax.f32 %v192, 0.0
    %vm195 = vcmask 64512
    %v197 = vsel %vm195, %v193, 0
    %199 = vmatpush.msra.mxu0 0.0
    %200 = vmatpush.msra.mxu0 0.0
    %201 = vmatpush.msra.mxu0 0.0
    %202 = vmatpush.msra.mxu0 0.0
    %203 = vmatpush.msra.mxu0 0.0
    %204 = vmatpush.msra.mxu0 0.0
    %205 = vmatpush.msra.mxu0 0.0
    %206 = vmatpush.msra.mxu0 0.0
    %207 = vmatpush.msra.mxu0 0.0
    %208 = vmatpush.msra.mxu0 0.0
    %209 = vmatpush.msra.mxu0 0.0
    %210 = vmatpush.msra.mxu0 0.0
    %211 = vmatpush.msra.mxu0 0.0
    %212 = vmatpush.msra.mxu0 0.0
    %213 = vmatpush.msra.mxu0 0.0
    %214 = vmatpush.msra.mxu0 %v131
    %215 = vmatmul.f32.gmra.mxu0 %v197
    %v216 = vpop.f32.mrf.mxu0
    %v217 = vadd.f32 0.0, %v216
    %218 = vdwg.mxu0
    %v220 = vsel %vm195, %v194, 0
    %222 = vmatpush.msra.mxu0 0.0
    %223 = vmatpush.msra.mxu0 0.0
    %224 = vmatpush.msra.mxu0 0.0
    %225 = vmatpush.msra.mxu0 0.0
    %226 = vmatpush.msra.mxu0 0.0
    %227 = vmatpush.msra.mxu0 0.0
    %228 = vmatpush.msra.mxu0 0.0
    %229 = vmatpush.msra.mxu0 0.0
    %230 = vmatpush.msra.mxu0 0.0
    %231 = vmatpush.msra.mxu0 0.0
    %232 = vmatpush.msra.mxu0 0.0
    %233 = vmatpush.msra.mxu0 0.0
    %234 = vmatpush.msra.mxu0 0.0
    %235 = vmatpush.msra.mxu0 0.0
    %236 = vmatpush.msra.mxu0 0.0
    %237 = vmatpush.msra.mxu0 %v132
    %238 = vmatmul.f32.gmra.mxu0 %v220
    %v239 = vpop.f32.mrf.mxu0
    %v240 = vadd.f32 0.0, %v239
    %241 = vdwg.mxu0
    %v242 = vld [vmem:[#allocation3] sm:$0x3]
    %v245 = vrot.slane %v240, 7
    %vm246 = vcmask 1041409
    %v247 = vsel %vm246, %v245, %v217
    %v249 = vadd.f32 %v242, %v247
    %vm250 = vcmask 254976
    %251 = vst.msk [vmem:[#allocation3] sm:$0x3] %vm250, %v249
    // Predicated region
    $region46: #{tpu_custom_call.1} parent=1 // pred_check
      %p252 = pneg %p95
    $region47: #{tpu_custom_call.1} parent=1 // pred_check_branch
      %254 = sbr.rel (%p252) target = $region49
    $region48: #{tpu_custom_call.1} parent=1 // pred_region
      %v255 = vld [vmem:[#allocation12] sm:$0xff]
      %v256 = vld [vmem:[#allocation12 + $0x8] sm:$0xff]
      %v257 = vld [vmem:[#allocation12 + $0x10] sm:$0xff]
      %v258 = vld [vmem:[#allocation12 + $0x18] sm:$0xff]
      %v259 = vld [vmem:[#allocation3] sm:$0x3]
      %v260 = vld [vmem:[#allocation4] sm:$0x3]
      %v262 = vsel %vm136, %v259, 0
      %264 = vmatpush.msra.mxu0 0.0
      %265 = vmatpush.msra.mxu0 0.0
      %266 = vmatpush.msra.mxu0 0.0
      %267 = vmatpush.msra.mxu0 0.0
      %268 = vmatpush.msra.mxu0 0.0
      %269 = vmatpush.msra.mxu0 0.0
      %270 = vmatpush.msra.mxu0 0.0
      %271 = vmatpush.msra.mxu0 0.0
      %272 = vmatpush.msra.mxu0 0.0
      %273 = vmatpush.msra.mxu0 0.0
      %274 = vmatpush.msra.mxu0 0.0
      %275 = vmatpush.msra.mxu0 0.0
      %276 = vmatpush.msra.mxu0 %v258
      %277 = vmatpush.msra.mxu0 %v257
      %278 = vmatpush.msra.mxu0 %v256
      %279 = vmatpush.msra.mxu0 %v255
      %280 = vmatmul.f32.gmra.mxu0 %v262
      %v281 = vpop.f32.mrf.mxu0
      %v282 = vadd.f32 %v260, %v281
      %283 = vdwg.mxu0
      %284 = vst.msk [vmem:[#allocation13] sm:$0x3] %vm250, %v282
    $region49: #{tpu_custom_call.1} parent=1 // pred_fallthru
      _
    // Predicated region
    $region50: #{tpu_custom_call.1} parent=1 // pred_check
      _
    $region51: #{tpu_custom_call.1} parent=1 // pred_check_branch
      %286 = sbr.rel (0) target = $region53
    $region52: #{tpu_custom_call.1} parent=1 // pred_region
      %288 = vsyncadd [#allocation6], 0
      %s290 = sshll.u32 [#allocation13], 4
      %s291 = int_to_ptr.vmem [resolvable:$true] %s290
      %s292 = sshll.u32 %s5, 4
      %s293 = int_to_ptr.hbm [resolvable:$true] %s292
      %295 = dma.vmem_to_hbm [thread:$0]  %s291, 32, %s293, [#allocation6]
    $region53: #{tpu_custom_call.1} parent=1 // pred_fallthru
      _
    // Predicated region
    $region54: #{tpu_custom_call.1} parent=1 // pred_check
      _
    $region55: #{tpu_custom_call.1} parent=1 // pred_check_branch
      %297 = sbr.rel (0) target = $region57
    $region56: #{tpu_custom_call.1} parent=1 // pred_region
      %299 = dma.done [#allocation6], 32
    $region57: #{tpu_custom_call.1} parent=1 // pred_fallthru
      _
    %300 = vsyncpa [#allocation5], 1
    %301 = vsyncpa [#allocation8], 1
    %302 = vsyncpa [#allocation11], 1
    %303 = vsyncpa [#allocation6], 1

// kernel: tpu_custom_call.1
$region0: #{tpu_custom_call.1}
  #allocation0 [shape = 'u32[]', space=smem, size = 0x4, offset = 0x4, fixed_abs, tag = 'smem constant byte address 0x4 - core index']
  #allocation1 [shape = 'u32[72,128]{1,0:T(1,128)}', space=vmem, size = 0x9000, scoped, tag = 'internal scratch']
  #allocation2 [shape = 'f32[2,32]{1,0:T(2,128)}', space=vmem, size = 0x400, scoped, tag = 'scratch operand']
  #allocation3 [shape = 'f32[2,32]{1,0:T(2,128)}', space=vmem, size = 0x400, scoped, tag = 'scratch operand']
  %s0 = inlined_call_operand.hbm [shape: f32[2,32], index: 0, kind: input, shape index: {}]
  %s1 = inlined_call_operand.hbm [shape: f32[2,8,32], index: 1, kind: input, shape index: {}]
  %s2 = inlined_call_operand.hbm [shape: f32[2,8], index: 2, kind: input, shape index: {}]
  %s3 = inlined_call_operand.hbm [shape: f32[32,32], index: 3, kind: input, shape index: {}]
  %s4 = inlined_call_operand.hbm [shape: f32[32,32], index: 4, kind: input, shape index: {}]
  %s5 = inlined_call_operand.hbm [shape: f32[2,32], index: 5, kind: output, shape index: {}]
  %s6 = sld [smem:[#allocation0]]
  $region58: #{tpu_custom_call.1} parent=0
    _
  %s8 = ssub.s32 1, %s6
  %s9 = scalar_select 0, %s8, %s6
  $region1: #{tpu_custom_call.1} parent=0
    #allocation4 [shape = 'u8[1024]{0}', space=vmem, size = 0x400, scoped, tag = 'input window, operand 0, single buffered']
    #allocation5 [shape = 's32[1]{0}', space=sflag, size = 0x4, scoped, tag = 'scoped memory for tpu_custom_call.1']
    #allocation6 [shape = 's32[1]{0}', space=sflag, size = 0x4, scoped, tag = 'scoped memory for tpu_custom_call.1']
    #allocation7 [shape = 'u8[8192]{0}', space=vmem, size = 0x2000, scoped, tag = 'input window, operand 1, single buffered']
    #allocation8 [shape = 's32[1]{0}', space=sflag, size = 0x4, scoped, tag = 'scoped memory for tpu_custom_call.1']
    #allocation9 [shape = 'u8[1024]{0}', space=vmem, size = 0x400, scoped, tag = 'input window, operand 2, single buffered']
    #allocation10 [shape = 'u8[16384]{0}', space=vmem, size = 0x4000, scoped, tag = 'input window, operand 3, single buffered']
    #allocation11 [shape = 's32[1]{0}', space=sflag, size = 0x4, scoped, tag = 'scoped memory for tpu_custom_call.1']
    #allocation12 [shape = 'u8[16384]{0}', space=vmem, size = 0x4000, scoped, tag = 'input window, operand 4, single buffered']
    #allocation13 [shape = 'u8[1024]{0}', space=vmem, size = 0x400, scoped, tag = 'output window, operand 0, single buffered']
    %10 = vsyncpa [#allocation5], 0
    %11 = vsyncpa [#allocation8], 0
    %12 = vsyncpa [#allocation11], 0
    %13 = vsyncpa [#allocation6], 0
    // Predicated region
    $region2: #{tpu_custom_call.1} parent=1 // pred_check
      _
    $region3: #{tpu_custom_call.1} parent=1 // pred_check_branch
      %15 = sbr.rel (0) target = $region5
    $region4: #{tpu_custom_call.1} parent=1 // pred_region
      %17 = vsyncadd [#allocation5], 0
      %s19 = sshll.u32 %s0, 4
      %s20 = int_to_ptr.hbm [resolvable:$true] %s19
      %s21 = sshll.u32 [#allocation4], 4
      %s22 = int_to_ptr.vmem [resolvable:$true] %s21
      %24 = dma.hbm_to_vmem [thread:$0]  %s20, 32, %s22, [#allocation5]
    $region5: #{tpu_custom_call.1} parent=1 // pred_fallthru
      _
    // Predicated region
    $region6: #{tpu_custom_call.1} parent=1 // pred_check
      _
    $region7: #{tpu_custom_call.1} parent=1 // pred_check_branch
      %26 = sbr.rel (0) target = $region9
    $region8: #{tpu_custom_call.1} parent=1 // pred_region
      %28 = vsyncadd [#allocation8], 0
      %s29 = sshll.u32 %s1, 4
      %s30 = int_to_ptr.hbm [resolvable:$true] %s29
      %s31 = sshll.u32 [#allocation7], 4
      %s32 = int_to_ptr.vmem [resolvable:$true] %s31
      %37 = dma.hbm_to_vmem [thread:$0]  %s30, 256, %s32, [#allocation8], 128, 128, 8
    $region9: #{tpu_custom_call.1} parent=1 // pred_fallthru
      _
    // Predicated region
    $region10: #{tpu_custom_call.1} parent=1 // pred_check
      _
    $region11: #{tpu_custom_call.1} parent=1 // pred_check_branch
      %39 = sbr.rel (0) target = $region13
    $region12: #{tpu_custom_call.1} parent=1 // pred_region
      %41 = vsyncadd [#allocation8], 0
      %s43 = sshll.u32 %s2, 4
      %s44 = int_to_ptr.hbm [resolvable:$true] %s43
      %s45 = sshll.u32 [#allocation9], 4
      %s46 = int_to_ptr.vmem [resolvable:$true] %s45
      %48 = dma.hbm_to_vmem [thread:$0]  %s44, 32, %s46, [#allocation8]
    $region13: #{tpu_custom_call.1} parent=1 // pred_fallthru
      _
    // Predicated region
    $region14: #{tpu_custom_call.1} parent=1 // pred_check
      _
    $region15: #{tpu_custom_call.1} parent=1 // pred_check_branch
      %50 = sbr.rel (0) target = $region17
    $region16: #{tpu_custom_call.1} parent=1 // pred_region
      %52 = vsyncadd [#allocation11], 0
      %s53 = sshll.u32 %s3, 4
      %s54 = int_to_ptr.hbm [resolvable:$true] %s53
      %s55 = sshll.u32 [#allocation10], 4
      %s56 = int_to_ptr.vmem [resolvable:$true] %s55
      %61 = dma.hbm_to_vmem [thread:$0]  %s54, 512, %s56, [#allocation11], 128, 128, 8
    $region17: #{tpu_custom_call.1} parent=1 // pred_fallthru
      _
    // Predicated region
    $region18: #{tpu_custom_call.1} parent=1 // pred_check
      _
    $region19: #{tpu_custom_call.1} parent=1 // pred_check_branch
      %63 = sbr.rel (0) target = $region21
    $region20: #{tpu_custom_call.1} parent=1 // pred_region
      %65 = vsyncadd [#allocation11], 0
      %s66 = sshll.u32 %s4, 4
      %s67 = int_to_ptr.hbm [resolvable:$true] %s66
      %s68 = sshll.u32 [#allocation12], 4
      %s69 = int_to_ptr.vmem [resolvable:$true] %s68
      %74 = dma.hbm_to_vmem [thread:$0]  %s67, 512, %s69, [#allocation11], 128, 128, 8
    $region21: #{tpu_custom_call.1} parent=1 // pred_fallthru
      _
    // Predicated region
    $region22: #{tpu_custom_call.1} parent=1 // pred_check
      _
    $region23: #{tpu_custom_call.1} parent=1 // pred_check_branch
      %76 = sbr.rel (0) target = $region25
    $region24: #{tpu_custom_call.1} parent=1 // pred_region
      %78 = dma.done [#allocation5], 32
    $region25: #{tpu_custom_call.1} parent=1 // pred_fallthru
      _
    // Predicated region
    $region26: #{tpu_custom_call.1} parent=1 // pred_check
      _
    $region27: #{tpu_custom_call.1} parent=1 // pred_check_branch
      %80 = sbr.rel (0) target = $region29
    $region28: #{tpu_custom_call.1} parent=1 // pred_region
      %82 = dma.done [#allocation8], 256
    $region29: #{tpu_custom_call.1} parent=1 // pred_fallthru
      _
    // Predicated region
    $region30: #{tpu_custom_call.1} parent=1 // pred_check
      _
    $region31: #{tpu_custom_call.1} parent=1 // pred_check_branch
      %84 = sbr.rel (0) target = $region33
    $region32: #{tpu_custom_call.1} parent=1 // pred_region
      %86 = dma.done [#allocation8], 32
    $region33: #{tpu_custom_call.1} parent=1 // pred_fallthru
      _
    // Predicated region
    $region34: #{tpu_custom_call.1} parent=1 // pred_check
      _
    $region35: #{tpu_custom_call.1} parent=1 // pred_check_branch
      %88 = sbr.rel (0) target = $region37
    $region36: #{tpu_custom_call.1} parent=1 // pred_region
      %90 = dma.done [#allocation11], 512
    $region37: #{tpu_custom_call.1} parent=1 // pred_fallthru
      _
    // Predicated region
    $region38: #{tpu_custom_call.1} parent=1 // pred_check
      _
    $region39: #{tpu_custom_call.1} parent=1 // pred_check_branch
      %92 = sbr.rel (0) target = $region41
    $region40: #{tpu_custom_call.1} parent=1 // pred_region
      %94 = dma.done [#allocation11], 512
    $region41: #{tpu_custom_call.1} parent=1 // pred_fallthru
      _
    %p95 = scmp.eq.s32.totalorder 0, 0
    // Predicated region
    $region42: #{tpu_custom_call.1} parent=1 // pred_check
      %p96 = pneg %p95
    $region43: #{tpu_custom_call.1} parent=1 // pred_check_branch
      %98 = sbr.rel (%p96) target = $region45
    $region44: #{tpu_custom_call.1} parent=1 // pred_region
      %v99 = vld [vmem:[#allocation4] sm:$0x3]
      %v100 = vld [vmem:[#allocation10] sm:$0xff]
      %v101 = vld [vmem:[#allocation10 + $0x8] sm:$0xff]
      %v102 = vld [vmem:[#allocation10 + $0x10] sm:$0xff]
      %v103 = vld [vmem:[#allocation10 + $0x18] sm:$0xff]
      %vm104 = vcmask 261120
      %v106 = vsel %vm104, %v99, 0
      %108 = vmatpush.msra.mxu0 0.0
      %109 = vmatpush.msra.mxu0 0.0
      %110 = vmatpush.msra.mxu0 0.0
      %111 = vmatpush.msra.mxu0 0.0
      %112 = vmatpush.msra.mxu0 0.0
      %113 = vmatpush.msra.mxu0 0.0
      %114 = vmatpush.msra.mxu0 0.0
      %115 = vmatpush.msra.mxu0 0.0
      %116 = vmatpush.msra.mxu0 0.0
      %117 = vmatpush.msra.mxu0 0.0
      %118 = vmatpush.msra.mxu0 0.0
      %119 = vmatpush.msra.mxu0 0.0
      %120 = vmatpush.msra.mxu0 %v103
      %121 = vmatpush.msra.mxu0 %v102
      %122 = vmatpush.msra.mxu0 %v101
      %123 = vmatpush.msra.mxu0 %v100
      %124 = vmatmul.f32.gmra.mxu0 %v106
      %v125 = vpop.f32.mrf.mxu0
      %v126 = vadd.f32 0.0, %v125
      %127 = vdwg.mxu0
      %vm128 = vcmask 254976
      %129 = vst.msk [vmem:[#allocation2] sm:$0x3] %vm128, %v126
      %130 = vst.msk [vmem:[#allocation3] sm:$0x3] %vm128, 0.0
    $region45: #{tpu_custom_call.1} parent=1 // pred_fallthru
      _
    %v131 = vld [vmem:[#allocation7] sm:$0xff]
    %v132 = vld [vmem:[#allocation7 + $0x8] sm:$0xff]
    %v133 = vld [vmem:[#allocation2] sm:$0x3]
    %v135 = vrot.slane %v133, 1
    %v136 = vperm.slane %v133, 0
    %v137 = vperm.slane %v135, 0
    %v140 = vmul.f32 %v136, %v131
    %v141 = vmul.f32 %v137, %v132
    %vm142 = vcmask 261120
    %v143 = vsel %vm142, %v140, 0.0
    %144 = vadd.xlane.f32.xlu0 %v143
    %v145 = vpop.xlane.xlu0 %144
    %v146 = vsel %vm142, %v141, 0.0
    %147 = vadd.xlane.f32.xlu0 %v146
    %v148 = vpop.xlane.xlu0 %147
    %v149 = vld [vmem:[#allocation9] sm:$0x3]
    %v151 = vperm.slane %v149, 0
    %v152 = vlaneseq
    %v153 = vshrl.u32 %v152, 7
    %155 = vset.pattern.permute.xlu0 %v153
    %156 = vperm.xlu0 %155, %v151
    %v157 = vpop.permute.xlu0 %156
    %v158 = vperm.slane %v149, 1
    %v159 = vlaneseq
    %v160 = vshrl.u32 %v159, 7
    %162 = vset.pattern.permute.xlu0 %v160
    %163 = vperm.xlu0 %162, %v158
    %v164 = vpop.permute.xlu0 %163
    %v167 = vmul.f32 %v145, %v157
    %v168 = vmul.f32 %v148, %v164
    %v169 = vmax.f32 %v167, 0.0
    %v170 = vmax.f32 %v168, 0.0
    %v171 = vld [vmem:[#allocation3] sm:$0x3]
    %173 = vset.pattern.permute.xlu0 0
    %174 = vperm.xlu0 %173, %v169
    %v175 = vpop.permute.xlu0 %174
    %178 = vset.pattern.permute.xlu0 0
    %179 = vperm.xlu0 %178, %v170
    %v180 = vpop.permute.xlu0 %179
    %v182 = vmul.f32 %v175, %v131
    %v183 = vmul.f32 %v180, %v132
    %v184 = vsel %vm142, %v182, 0.0
    %v185 = vrot.slane %v184, 4
    %v186 = vadd.f32 %v184, %v185
    %v187 = vrot.slane %v186, 2
    %v188 = vadd.f32 %v186, %v187
    %v189 = vrot.slane %v188, 1
    %v190 = vadd.f32 %v188, %v189
    %v191 = vsel %vm142, %v183, 0.0
    %v192 = vrot.slane %v191, 4
    %v193 = vadd.f32 %v191, %v192
    %v194 = vrot.slane %v193, 2
    %v195 = vadd.f32 %v193, %v194
    %v196 = vrot.slane %v195, 1
    %v197 = vadd.f32 %v195, %v196
    %vm200 = vcmask 1041409
    %v201 = vsel %vm200, %v197, %v190
    %v203 = vadd.f32 %v171, %v201
    %vm204 = vcmask 254976
    %205 = vst.msk [vmem:[#allocation3] sm:$0x3] %vm204, %v203
    // Predicated region
    $region46: #{tpu_custom_call.1} parent=1 // pred_check
      %p206 = pneg %p95
    $region47: #{tpu_custom_call.1} parent=1 // pred_check_branch
      %208 = sbr.rel (%p206) target = $region49
    $region48: #{tpu_custom_call.1} parent=1 // pred_region
      %v209 = vld [vmem:[#allocation12] sm:$0xff]
      %v210 = vld [vmem:[#allocation12 + $0x8] sm:$0xff]
      %v211 = vld [vmem:[#allocation12 + $0x10] sm:$0xff]
      %v212 = vld [vmem:[#allocation12 + $0x18] sm:$0xff]
      %v213 = vld [vmem:[#allocation3] sm:$0x3]
      %v214 = vld [vmem:[#allocation4] sm:$0x3]
      %v216 = vsel %vm142, %v213, 0
      %218 = vmatpush.msra.mxu0 0.0
      %219 = vmatpush.msra.mxu0 0.0
      %220 = vmatpush.msra.mxu0 0.0
      %221 = vmatpush.msra.mxu0 0.0
      %222 = vmatpush.msra.mxu0 0.0
      %223 = vmatpush.msra.mxu0 0.0
      %224 = vmatpush.msra.mxu0 0.0
      %225 = vmatpush.msra.mxu0 0.0
      %226 = vmatpush.msra.mxu0 0.0
      %227 = vmatpush.msra.mxu0 0.0
      %228 = vmatpush.msra.mxu0 0.0
      %229 = vmatpush.msra.mxu0 0.0
      %230 = vmatpush.msra.mxu0 %v212
      %231 = vmatpush.msra.mxu0 %v211
      %232 = vmatpush.msra.mxu0 %v210
      %233 = vmatpush.msra.mxu0 %v209
      %234 = vmatmul.f32.gmra.mxu0 %v216
      %v235 = vpop.f32.mrf.mxu0
      %v236 = vadd.f32 %v214, %v235
      %237 = vdwg.mxu0
      %238 = vst.msk [vmem:[#allocation13] sm:$0x3] %vm204, %v236
    $region49: #{tpu_custom_call.1} parent=1 // pred_fallthru
      _
    // Predicated region
    $region50: #{tpu_custom_call.1} parent=1 // pred_check
      _
    $region51: #{tpu_custom_call.1} parent=1 // pred_check_branch
      %240 = sbr.rel (0) target = $region53
    $region52: #{tpu_custom_call.1} parent=1 // pred_region
      %242 = vsyncadd [#allocation6], 0
      %s244 = sshll.u32 [#allocation13], 4
      %s245 = int_to_ptr.vmem [resolvable:$true] %s244
      %s246 = sshll.u32 %s5, 4
      %s247 = int_to_ptr.hbm [resolvable:$true] %s246
      %249 = dma.vmem_to_hbm [thread:$0]  %s245, 32, %s247, [#allocation6]
    $region53: #{tpu_custom_call.1} parent=1 // pred_fallthru
      _
    // Predicated region
    $region54: #{tpu_custom_call.1} parent=1 // pred_check
      _
    $region55: #{tpu_custom_call.1} parent=1 // pred_check_branch
      %251 = sbr.rel (0) target = $region57
    $region56: #{tpu_custom_call.1} parent=1 // pred_region
      %253 = dma.done [#allocation6], 32
    $region57: #{tpu_custom_call.1} parent=1 // pred_fallthru
      _
    %254 = vsyncpa [#allocation5], 1
    %255 = vsyncpa [#allocation8], 1
    %256 = vsyncpa [#allocation11], 1
    %257 = vsyncpa [#allocation6], 1

</llo_original>
